<compile_context>
chip_gen: v7x
topology: tpu7x:2x2x1
jax: 0.10.0
libtpu: 0.0.40
codegen_flags: <defaults>
</compile_context>

<pallas_src>
import functools

import jax
import jax.numpy as jnp
from jax.experimental import pallas as pl
from jax.experimental.pallas import tpu as pltpu


def _geomgcn_agg_kernel(wh_ref, norm_ref, a_ref, o_ref, acc_ref):
    # wh_ref:   (D, TK, F_out)  bf16  source-tile slice of (X @ W_d^T) * norm_src
    # norm_ref: (TM, 1)         f32   destination-node norms
    # a_ref:    (D, TM, TK)     bf16  adjacency tiles, a[d, dst, src]
    # o_ref:    (TM, D*F_out)   f32   lane-dense output slab (merge='cat')
    # acc_ref:  (TM, D*F_out)   f32   VMEM accumulator (resident over src axis)
    k = pl.program_id(1)

    @pl.when(k == 0)
    def _init():
        acc_ref[...] = jnp.zeros_like(acc_ref)

    num_divisions = a_ref.shape[0]
    # One MXU matmul per division; concatenated along lanes -> a single
    # full-width accumulator update (keeps accumulator stores unmasked).
    parts = [
        jnp.dot(a_ref[d], wh_ref[d], preferred_element_type=jnp.float32)
        for d in range(num_divisions)
    ]
    acc_ref[...] += jnp.concatenate(parts, axis=-1)

    @pl.when(k == pl.num_programs(1) - 1)
    def _finalize():
        # h_new = relu(cat_d(h_d) * norm_dst)
        o_ref[...] = jnp.maximum(acc_ref[...] * norm_ref[...], 0.0).astype(o_ref.dtype)


def _pick_tile(n, target, align):
    """Largest multiple of `align` <= target that divides n, else the full n."""
    t = (min(target, n) // align) * align
    while t >= align:
        if n % t == 0:
            return t
        t -= align
    return n  # full extent is always a legal block dim


@functools.partial(jax.jit, static_argnames=("tm", "tk"))
def geomgcn_single_channel(x, norm, weights, adj, *, tm=512, tk=512):
    """GeomGCNSingleChannel forward (merge='cat', activation=ReLU, eval dropout).

    x:       (N, F_in)        float32 node features
    norm:    (N, 1)           float32 node norms
    weights: (D, F_out, F_in) float32 per-division linear weights (torch layout)
    adj:     (D, N, N)        per-division dense adjacency, adj[d, dst, src] in {0,1}
    returns: (N, D * F_out)   float32
    """
    n, _ = x.shape
    d, f_out, _ = weights.shape

    tm = _pick_tile(n, tm, 8)     # dst tile: sublane dim of A / rows of output
    tk = _pick_tile(n, tk, 128)   # src tile: lane dim of A / sublane dim of Wh

    # Hoisted linear: Wh_d = (X @ W_d^T) * norm_src, all divisions at once.
    wh = jnp.einsum("nf,dof->dno", x, weights)             # (D, N, F_out) f32
    wh = (wh * norm[None, :, :]).astype(jnp.bfloat16)

    # Adjacency values are exactly 0/1 -> bf16 is lossless and halves HBM
    # traffic of the dominant A stream.  (int8 would give 4x on v5e/v6e, but
    # the v7x MXU has no integer path; bf16 is the portable choice.)
    adj_b = adj.astype(jnp.bfloat16)

    cost = pl.CostEstimate(
        flops=2 * d * n * n * f_out,
        transcendentals=0,
        bytes_accessed=d * n * n * 2 + d * n * f_out * 2 + n * 4 + n * d * f_out * 4,
    )

    out = pl.pallas_call(
        _geomgcn_agg_kernel,
        out_shape=jax.ShapeDtypeStruct((n, d * f_out), jnp.float32),
        grid_spec=pltpu.PrefetchScalarGridSpec(
            num_scalar_prefetch=0,
            grid=(n // tm, n // tk),              # reduction (src) axis last
            in_specs=[
                pl.BlockSpec((d, tk, f_out), lambda i, k: (0, k, 0)),  # Wh (src tile)
                pl.BlockSpec((tm, 1), lambda i, k: (i, 0)),            # norm (dst tile)
                pl.BlockSpec((d, tm, tk), lambda i, k: (0, i, k)),     # A tiles
            ],
            out_specs=pl.BlockSpec((tm, d * f_out), lambda i, k: (i, 0)),
            scratch_shapes=[pltpu.VMEM((tm, d * f_out), jnp.float32)],
        ),
        compiler_params=pltpu.CompilerParams(
            dimension_semantics=("parallel", "arbitrary"),
            vmem_limit_bytes=48 * 1024 * 1024,    # safe on v7x's 64 MiB VMEM
        ),
        cost_estimate=cost,
    )(wh, norm, adj_b)
    return out


def _reference(x, norm, weights, adj):
    # Pure-JAX reference following the module's math, matching the kernel's
    # (lossless-for-A, bf16-rounded-Wh) numerics path.
    wh = jnp.einsum("nf,dof->dno", x, weights) * norm[None, :, :]
    wh = wh.astype(jnp.bfloat16).astype(jnp.float32)
    adj_b = adj.astype(jnp.bfloat16).astype(jnp.float32)
    agg = jnp.einsum("dij,djo->dio", adj_b, wh)            # (D, N, F_out)
    h = jnp.transpose(agg, (1, 0, 2)).reshape(x.shape[0], -1)   # merge='cat'
    return jnp.maximum(h * norm, 0.0)


if __name__ == "__main__":
    # Small synthetic problem consistent with the module's forward.
    N = 64            # number of nodes
    F_IN = 32         # in_feats
    F_OUT = 16        # out_feats
    D = 4             # num_divisions
    N_EDGES = 256

    key = jax.random.PRNGKey(0)
    k_x, k_w, k_src, k_dst, k_div = jax.random.split(key, 5)

    # Node features.
    x = jax.random.normal(k_x, (N, F_IN), dtype=jnp.float32)

    # Xavier-uniform init for each division's Linear(in_feats, out_feats, bias=False):
    # weight shape (out_feats, in_feats), bound = sqrt(6 / (fan_in + fan_out)).
    bound = (6.0 / (F_IN + F_OUT)) ** 0.5
    weights = jax.random.uniform(
        k_w, (D, F_OUT, F_IN), dtype=jnp.float32, minval=-bound, maxval=bound)

    # Random graph: N_EDGES directed edges, each assigned to one division.
    src = jax.random.randint(k_src, (N_EDGES,), 0, N)
    dst = jax.random.randint(k_dst, (N_EDGES,), 0, N)
    div = jax.random.randint(k_div, (N_EDGES,), 0, D)

    # Dense per-division adjacency: adj[d, dst, src] = 1.0 for edge src->dst in division d.
    adj = jnp.zeros((D, N, N), dtype=jnp.float32).at[div, dst, src].set(1.0)

    # Node 'norm' feature (GCN-style symmetric norm over total in-degree).
    deg = adj.sum(axis=(0, 2))  # in-degree per node over all divisions
    norm = (1.0 / jnp.sqrt(jnp.maximum(deg, 1.0))).reshape(N, 1).astype(jnp.float32)

    out = geomgcn_single_channel(x, norm, weights, adj)
    out = jax.block_until_ready(out)

    ref = _reference(x, norm, weights, adj)
    assert out.shape == (N, D * F_OUT), out.shape
    assert jnp.allclose(out, ref, atol=1e-3, rtol=1e-3), "mismatch vs reference"

    print("KERNEL_OK")
</pallas_src>

<mosaic_0001>
module attributes {stable_mosaic.version = 11 : i64} {
  func.func @_geomgcn_agg_kernel(%arg0: i32, %arg1: i32, %arg2: memref<4x64x16xbf16, #tpu.memory_space<vmem>>, %arg3: memref<64x1xf32, #tpu.memory_space<vmem>>, %arg4: memref<4x64x64xbf16, #tpu.memory_space<vmem>>, %arg5: memref<64x64xf32, #tpu.memory_space<vmem>>, %arg6: memref<64x64xf32, #tpu.memory_space<vmem>>) attributes {dimension_semantics = [#tpu.dimension_semantics<parallel>, #tpu.dimension_semantics<arbitrary>], iteration_bounds = array<i64: 1, 1>, scalar_prefetch = 0 : i64, scratch_operands = 1 : i64, tpu.core_type = #tpu.core_type<tc>, window_params = [{transform_indices = @transform_0, window_bounds = array<i64: 4, 64, 16>}, {transform_indices = @transform_1, window_bounds = array<i64: 64, 1>}, {transform_indices = @transform_2, window_bounds = array<i64: 4, 64, 64>}, {transform_indices = @transform_3, window_bounds = array<i64: 64, 64>}]} {
    %c0_i32 = arith.constant 0 : i32
    %0 = arith.cmpi eq, %arg1, %c0_i32 : i32
    %1 = arith.extui %0 : i1 to i32
    %c0_i32_0 = arith.constant 0 : i32
    %2 = arith.cmpi ne, %1, %c0_i32_0 : i32
    scf.if %2 {
      %cst_30 = arith.constant 0.000000e+00 : f32
      %30 = vector.broadcast %cst_30 : f32 to vector<64x64xf32>
      %c0_31 = arith.constant 0 : index
      %c0_32 = arith.constant 0 : index
      %31 = vector.load %arg6[%c0_31, %c0_32] : memref<64x64xf32, #tpu.memory_space<vmem>>, vector<64x64xf32>
      tpu.vector_store %arg6[%c0_31, %c0_32], %30 {strides = array<i32>} : memref<64x64xf32, #tpu.memory_space<vmem>>, vector<64x64xf32>,
    } else {
    }
    %c0 = arith.constant 0 : index
    %c0_1 = arith.constant 0 : index
    %c0_2 = arith.constant 0 : index
    %3 = vector.load %arg4[%c0, %c0_1, %c0_2] : memref<4x64x64xbf16, #tpu.memory_space<vmem>>, vector<1x64x64xbf16>
    %4 = vector.shape_cast %3 : vector<1x64x64xbf16> to vector<64x64xbf16>
    %c0_3 = arith.constant 0 : index
    %c0_4 = arith.constant 0 : index
    %c0_5 = arith.constant 0 : index
    %5 = vector.load %arg2[%c0_3, %c0_4, %c0_5] : memref<4x64x16xbf16, #tpu.memory_space<vmem>>, vector<1x64x16xbf16>
    %6 = vector.shape_cast %5 : vector<1x64x16xbf16> to vector<64x16xbf16>
    %cst = arith.constant dense<0.000000e+00> : vector<64x16xf32>
    %7 = tpu.matmul %4, %6, %cst {dimension_numbers = #tpu.dot_dimension_numbers<[1], [0], [0], [1], [0, 0, 1, 1], [], []>} : vector<64x64xbf16>, vector<64x16xbf16>, vector<64x16xf32> -> vector<64x16xf32>
    %c1 = arith.constant 1 : index
    %c0_6 = arith.constant 0 : index
    %c0_7 = arith.constant 0 : index
    %8 = vector.load %arg4[%c1, %c0_6, %c0_7] : memref<4x64x64xbf16, #tpu.memory_space<vmem>>, vector<1x64x64xbf16>
    %9 = vector.shape_cast %8 : vector<1x64x64xbf16> to vector<64x64xbf16>
    %c1_8 = arith.constant 1 : index
    %c0_9 = arith.constant 0 : index
    %c0_10 = arith.constant 0 : index
    %10 = vector.load %arg2[%c1_8, %c0_9, %c0_10] : memref<4x64x16xbf16, #tpu.memory_space<vmem>>, vector<1x64x16xbf16>
    %11 = vector.shape_cast %10 : vector<1x64x16xbf16> to vector<64x16xbf16>
    %cst_11 = arith.constant dense<0.000000e+00> : vector<64x16xf32>
    %12 = tpu.matmul %9, %11, %cst_11 {dimension_numbers = #tpu.dot_dimension_numbers<[1], [0], [0], [1], [0, 0, 1, 1], [], []>} : vector<64x64xbf16>, vector<64x16xbf16>, vector<64x16xf32> -> vector<64x16xf32>
    %c2 = arith.constant 2 : index
    %c0_12 = arith.constant 0 : index
    %c0_13 = arith.constant 0 : index
    %13 = vector.load %arg4[%c2, %c0_12, %c0_13] : memref<4x64x64xbf16, #tpu.memory_space<vmem>>, vector<1x64x64xbf16>
    %14 = vector.shape_cast %13 : vector<1x64x64xbf16> to vector<64x64xbf16>
    %c2_14 = arith.constant 2 : index
    %c0_15 = arith.constant 0 : index
    %c0_16 = arith.constant 0 : index
    %15 = vector.load %arg2[%c2_14, %c0_15, %c0_16] : memref<4x64x16xbf16, #tpu.memory_space<vmem>>, vector<1x64x16xbf16>
    %16 = vector.shape_cast %15 : vector<1x64x16xbf16> to vector<64x16xbf16>
    %cst_17 = arith.constant dense<0.000000e+00> : vector<64x16xf32>
    %17 = tpu.matmul %14, %16, %cst_17 {dimension_numbers = #tpu.dot_dimension_numbers<[1], [0], [0], [1], [0, 0, 1, 1], [], []>} : vector<64x64xbf16>, vector<64x16xbf16>, vector<64x16xf32> -> vector<64x16xf32>
    %c3 = arith.constant 3 : index
    %c0_18 = arith.constant 0 : index
    %c0_19 = arith.constant 0 : index
    %18 = vector.load %arg4[%c3, %c0_18, %c0_19] : memref<4x64x64xbf16, #tpu.memory_space<vmem>>, vector<1x64x64xbf16>
    %19 = vector.shape_cast %18 : vector<1x64x64xbf16> to vector<64x64xbf16>
    %c3_20 = arith.constant 3 : index
    %c0_21 = arith.constant 0 : index
    %c0_22 = arith.constant 0 : index
    %20 = vector.load %arg2[%c3_20, %c0_21, %c0_22] : memref<4x64x16xbf16, #tpu.memory_space<vmem>>, vector<1x64x16xbf16>
    %21 = vector.shape_cast %20 : vector<1x64x16xbf16> to vector<64x16xbf16>
    %cst_23 = arith.constant dense<0.000000e+00> : vector<64x16xf32>
    %22 = tpu.matmul %19, %21, %cst_23 {dimension_numbers = #tpu.dot_dimension_numbers<[1], [0], [0], [1], [0, 0, 1, 1], [], []>} : vector<64x64xbf16>, vector<64x16xbf16>, vector<64x16xf32> -> vector<64x16xf32>
    %c0_24 = arith.constant 0 : index
    %c0_25 = arith.constant 0 : index
    %23 = vector.load %arg6[%c0_24, %c0_25] : memref<64x64xf32, #tpu.memory_space<vmem>>, vector<64x64xf32>
    %24 = tpu.concatenate %7, %12, %17, %22 in 1 : vector<64x16xf32>, vector<64x16xf32>, vector<64x16xf32>, vector<64x16xf32> -> vector<64x64xf32>
    %25 = arith.addf %23, %24 : vector<64x64xf32>
    %c0_26 = arith.constant 0 : index
    %c0_27 = arith.constant 0 : index
    %26 = vector.load %arg6[%c0_26, %c0_27] : memref<64x64xf32, #tpu.memory_space<vmem>>, vector<64x64xf32>
    tpu.vector_store %arg6[%c0_26, %c0_27], %25 {strides = array<i32>} : memref<64x64xf32, #tpu.memory_space<vmem>>, vector<64x64xf32>,
    %c0_i32_28 = arith.constant 0 : i32
    %27 = arith.cmpi eq, %arg1, %c0_i32_28 : i32
    %28 = arith.extui %27 : i1 to i32
    %c0_i32_29 = arith.constant 0 : i32
    %29 = arith.cmpi ne, %28, %c0_i32_29 : i32
    scf.if %29 {
      %c0_30 = arith.constant 0 : index
      %c0_31 = arith.constant 0 : index
      %30 = vector.load %arg6[%c0_30, %c0_31] : memref<64x64xf32, #tpu.memory_space<vmem>>, vector<64x64xf32>
      %c0_32 = arith.constant 0 : index
      %c0_33 = arith.constant 0 : index
      %31 = vector.load %arg3[%c0_32, %c0_33] : memref<64x1xf32, #tpu.memory_space<vmem>>, vector<64x1xf32>
      %32 = vector.broadcast %31 : vector<64x1xf32> to vector<64x64xf32>
      %33 = arith.mulf %30, %32 : vector<64x64xf32>
      %cst_34 = arith.constant 0.000000e+00 : f32
      %34 = vector.broadcast %cst_34 : f32 to vector<64x64xf32>
      %35 = arith.maximumf %33, %34 : vector<64x64xf32>
      %c0_35 = arith.constant 0 : index
      %c0_36 = arith.constant 0 : index
      %36 = vector.load %arg5[%c0_35, %c0_36] : memref<64x64xf32, #tpu.memory_space<vmem>>, vector<64x64xf32>
      tpu.vector_store %arg5[%c0_35, %c0_36], %35 {strides = array<i32>} : memref<64x64xf32, #tpu.memory_space<vmem>>, vector<64x64xf32>,
    } else {
    }
    return
  }
  func.func @transform_0(%arg0: i32, %arg1: i32) -> (i32, i32, i32) {
    %c0_i32 = arith.constant 0 : i32
    %c0_i32_0 = arith.constant 0 : i32
    %c0_i32_1 = arith.constant 0 : i32
    return %c0_i32, %arg1, %c0_i32_0 : i32, i32, i32
  }
  func.func @transform_1(%arg0: i32, %arg1: i32) -> (i32, i32) {
    %c0_i32 = arith.constant 0 : i32
    %c0_i32_0 = arith.constant 0 : i32
    return %arg0, %c0_i32 : i32, i32
  }
  func.func @transform_2(%arg0: i32, %arg1: i32) -> (i32, i32, i32) {
    %c0_i32 = arith.constant 0 : i32
    %c0_i32_0 = arith.constant 0 : i32
    return %c0_i32, %arg0, %arg1 : i32, i32, i32
  }
  func.func @transform_3(%arg0: i32, %arg1: i32) -> (i32, i32) {
    %c0_i32 = arith.constant 0 : i32
    %c0_i32_0 = arith.constant 0 : i32
    return %arg0, %c0_i32 : i32, i32
  }
}

</mosaic_0001>

<llo_original>
// kernel: geomgcn_single_channel.1
$region0: #{geomgcn_single_channel.1}
  #allocation0 [shape = 'u32[]', space=smem, size = 0x4, offset = 0x4, fixed_abs, tag = 'smem constant byte address 0x4 - core index']
  #allocation1 [shape = 'u32[144,128]{1,0:T(1,128)}', space=vmem, size = 0x12000, scoped, tag = 'internal scratch']
  #allocation2 [shape = 'f32[64,64]{1,0:T(8,128)}', space=vmem, size = 0x8000, scoped, tag = 'scratch operand']
  %s0 = inlined_call_operand.vmem [shape: bf16[4,64,16], index: 0, kind: input, shape index: {}]
  %s1 = inlined_call_operand.vmem [shape: f32[64,1], index: 1, kind: input, shape index: {}]
  %s2 = inlined_call_operand.vmem [shape: bf16[4,64,64], index: 2, kind: input, shape index: {}]
  %s3 = inlined_call_operand.hbm [shape: f32[64,64], index: 3, kind: output, shape index: {}]
  %s4 = sld [smem:[#allocation0]]
  $region30: #{geomgcn_single_channel.1} parent=0
    _
  %s6 = ssub.s32 1, %s4
  %s7 = scalar_select 0, %s6, %s4
  $region1: #{geomgcn_single_channel.1} parent=0
    #allocation3 [shape = 'u8[32768]{0}', space=vmem, size = 0x8000, scoped, tag = 'output window, operand 0, single buffered']
    #allocation4 [shape = 's32[1]{0}', space=sflag, size = 0x4, scoped, tag = 'scoped memory for geomgcn_single_channel.1']
    %8 = vsyncpa [#allocation4], 0
    // Predicated region
    $region2: #{geomgcn_single_channel.1} parent=1 // pred_check
      _
    $region3: #{geomgcn_single_channel.1} parent=1 // pred_check_branch
      %10 = sbr.rel (0) target = $region5
    $region4: #{geomgcn_single_channel.1} parent=1 // pred_region
      _
    $region5: #{geomgcn_single_channel.1} parent=1 // pred_fallthru
      _
    // Predicated region
    $region6: #{geomgcn_single_channel.1} parent=1 // pred_check
      _
    $region7: #{geomgcn_single_channel.1} parent=1 // pred_check_branch
      %12 = sbr.rel (0) target = $region9
    $region8: #{geomgcn_single_channel.1} parent=1 // pred_region
      _
    $region9: #{geomgcn_single_channel.1} parent=1 // pred_fallthru
      _
    // Predicated region
    $region10: #{geomgcn_single_channel.1} parent=1 // pred_check
      _
    $region11: #{geomgcn_single_channel.1} parent=1 // pred_check_branch
      %14 = sbr.rel (0) target = $region13
    $region12: #{geomgcn_single_channel.1} parent=1 // pred_region
      _
    $region13: #{geomgcn_single_channel.1} parent=1 // pred_fallthru
      _
    %p16 = scmp.eq.s32.totalorder 0, 0
    // Predicated region
    $region14: #{geomgcn_single_channel.1} parent=1 // pred_check
      %p17 = pneg %p16
    $region15: #{geomgcn_single_channel.1} parent=1 // pred_check_branch
      %19 = sbr.rel (%p17) target = $region17
    $region16: #{geomgcn_single_channel.1} parent=1 // pred_region
      %vm20 = vcmask 523264
      %21 = vst.msk [vmem:[#allocation2] sm:$0xff] %vm20, 0.0
      %22 = vst.msk [vmem:[#allocation2 + $0x8] sm:$0xff] %vm20, 0.0
      %23 = vst.msk [vmem:[#allocation2 + $0x10] sm:$0xff] %vm20, 0.0
      %24 = vst.msk [vmem:[#allocation2 + $0x18] sm:$0xff] %vm20, 0.0
      %25 = vst.msk [vmem:[#allocation2 + $0x20] sm:$0xff] %vm20, 0.0
      %26 = vst.msk [vmem:[#allocation2 + $0x28] sm:$0xff] %vm20, 0.0
      %27 = vst.msk [vmem:[#allocation2 + $0x30] sm:$0xff] %vm20, 0.0
      %28 = vst.msk [vmem:[#allocation2 + $0x38] sm:$0xff] %vm20, 0.0
    $region17: #{geomgcn_single_channel.1} parent=1 // pred_fallthru
      _
    %v29 = vld [vmem:[%s2] sm:$0xf]
    %v30 = vld [vmem:[%s2 + $0x4] sm:$0xf]
    %v31 = vld [vmem:[%s2 + $0x8] sm:$0xf]
    %v32 = vld [vmem:[%s2 + $0xc] sm:$0xf]
    %v33 = vld [vmem:[%s2 + $0x10] sm:$0xf]
    %v34 = vld [vmem:[%s2 + $0x14] sm:$0xf]
    %v35 = vld [vmem:[%s2 + $0x18] sm:$0xf]
    %v36 = vld [vmem:[%s2 + $0x1c] sm:$0xf]
    %v37 = vld [vmem:[%s0] sm:$0xf]
    %v38 = vld [vmem:[%s0 + $0x4] sm:$0xf]
    %v39 = vld [vmem:[%s0 + $0x8] sm:$0xf]
    %v40 = vld [vmem:[%s0 + $0xc] sm:$0xf]
    %v41 = vld [vmem:[%s0 + $0x10] sm:$0xf]
    %v42 = vld [vmem:[%s0 + $0x14] sm:$0xf]
    %v43 = vld [vmem:[%s0 + $0x18] sm:$0xf]
    %v44 = vld [vmem:[%s0 + $0x1c] sm:$0xf]
    %v53 = vunpack.c.l.b16 %v29
    %v54 = vunpack.c.l.b16 %v30
    %v55 = vunpack.c.l.b16 %v31
    %v56 = vunpack.c.l.b16 %v32
    %v57 = vunpack.c.l.b16 %v33
    %v58 = vunpack.c.l.b16 %v34
    %v59 = vunpack.c.l.b16 %v35
    %v60 = vunpack.c.l.b16 %v36
    %v61 = vpack.c.b16 %v54, %v53
    %v62 = vpack.c.b16 %v56, %v55
    %v63 = vpack.c.b16 %v58, %v57
    %v64 = vpack.c.b16 %v60, %v59
    %v73 = vunpack.c.l.b16 %v37
    %v74 = vunpack.c.l.b16 %v38
    %v75 = vunpack.c.l.b16 %v39
    %v76 = vunpack.c.l.b16 %v40
    %v77 = vunpack.c.l.b16 %v41
    %v78 = vunpack.c.l.b16 %v42
    %v79 = vunpack.c.l.b16 %v43
    %v80 = vunpack.c.l.b16 %v44
    %v81 = vpack.c.b16 %v74, %v73
    %v82 = vpack.c.b16 %v76, %v75
    %v83 = vpack.c.b16 %v78, %v77
    %v84 = vpack.c.b16 %v80, %v79
    %vm89 = vcmask 523264
    %v91 = vsel %vm89, %v61, 0
    %v94 = vsel %vm89, %v62, 0
    %v97 = vsel %vm89, %v63, 0
    %v100 = vsel %vm89, %v64, 0
    %102 = vmatprep.subr.bf16.mxu0 0
    %103 = vmatpush1.bf16.msra.mxu0 %v81
    %104 = vmatprep.subr.bf16.mxu0 0
    %105 = vmatpush1.bf16.msra.mxu0 %v82
    %106 = vmatprep.subr.bf16.mxu0 0
    %107 = vmatpush1.bf16.msra.mxu0 %v83
    %108 = vmatprep.subr.bf16.mxu0 0
    %109 = vmatpush1.bf16.msra.mxu0 %v84
    %110 = vmatprep.subr.bf16.mxu0 0
    %111 = vmatpush1.bf16.msra.mxu0 0
    %112 = vmatprep.subr.bf16.mxu0 0
    %113 = vmatpush1.bf16.msra.mxu0 0
    %114 = vmatprep.subr.bf16.mxu0 0
    %115 = vmatpush1.bf16.msra.mxu0 0
    %116 = vmatprep.subr.bf16.mxu0 0
    %117 = vmatpush1.bf16.msra.mxu0 0
    %118 = vmatprep.subr.bf16.mxu0 0
    %119 = vmatpush1.bf16.msra.mxu0 0
    %120 = vmatprep.subr.bf16.mxu0 0
    %121 = vmatpush1.bf16.msra.mxu0 0
    %122 = vmatprep.subr.bf16.mxu0 0
    %123 = vmatpush1.bf16.msra.mxu0 0
    %124 = vmatprep.subr.bf16.mxu0 0
    %125 = vmatpush1.bf16.msra.mxu0 0
    %126 = vmatprep.subr.bf16.mxu0 0
    %127 = vmatpush1.bf16.msra.mxu0 0
    %128 = vmatprep.subr.bf16.mxu0 0
    %129 = vmatpush1.bf16.msra.mxu0 0
    %130 = vmatprep.subr.bf16.mxu0 0
    %131 = vmatpush1.bf16.msra.mxu0 0
    %132 = vmatprep.subr.bf16.mxu0 0
    %133 = vmatpush1.bf16.msra.mxu0 0
    %134 = vmatprep.mubr.bf16.mxu0 0
    %135 = vmatmul.mubr.bf16.gmra.mrb[0].mxu0 %v91
    %v136 = vpop.f32.mrb[0].mxu0
    %v137 = vadd.f32 0.0, %v136
    %v138 = vpop.f32.mrb[0].mxu0
    %v139 = vpop.f32.mrb[0].mxu0
    %v140 = vadd.f32 0.0, %v139
    %v141 = vpop.f32.mrb[0].mxu0
    %142 = vmatprep.mubr.bf16.mxu0 0
    %143 = vmatmul.mubr.bf16.gmra.mrb[0].mxu0 %v94
    %v144 = vpop.f32.mrb[0].mxu0
    %v145 = vadd.f32 0.0, %v144
    %v146 = vpop.f32.mrb[0].mxu0
    %v147 = vpop.f32.mrb[0].mxu0
    %v148 = vadd.f32 0.0, %v147
    %v149 = vpop.f32.mrb[0].mxu0
    %150 = vmatprep.mubr.bf16.mxu0 0
    %151 = vmatmul.mubr.bf16.gmra.mrb[0].mxu0 %v97
    %v152 = vpop.f32.mrb[0].mxu0
    %v153 = vadd.f32 0.0, %v152
    %v154 = vpop.f32.mrb[0].mxu0
    %v155 = vpop.f32.mrb[0].mxu0
    %v156 = vadd.f32 0.0, %v155
    %v157 = vpop.f32.mrb[0].mxu0
    %158 = vmatprep.mubr.bf16.mxu0 0
    %159 = vmatmul.mubr.bf16.gmra.mrb[0].mxu0 %v100
    %v160 = vpop.f32.mrb[0].mxu0
    %v161 = vadd.f32 0.0, %v160
    %v162 = vpop.f32.mrb[0].mxu0
    %v163 = vpop.f32.mrb[0].mxu0
    %v164 = vadd.f32 0.0, %v163
    %v165 = vpop.f32.mrb[0].mxu0
    %166 = vdwg.mxu0
    %s167 = scalar_lea.vmem %s2, 32
    %v168 = vld [vmem:[%s167] sm:$0xf]
    %v169 = vld [vmem:[%s167 + $0x4] sm:$0xf]
    %v170 = vld [vmem:[%s167 + $0x8] sm:$0xf]
    %v171 = vld [vmem:[%s167 + $0xc] sm:$0xf]
    %v172 = vld [vmem:[%s167 + $0x10] sm:$0xf]
    %v173 = vld [vmem:[%s167 + $0x14] sm:$0xf]
    %v174 = vld [vmem:[%s167 + $0x18] sm:$0xf]
    %v175 = vld [vmem:[%s167 + $0x1c] sm:$0xf]
    %s176 = scalar_lea.vmem %s0, 32
    %v177 = vld [vmem:[%s176] sm:$0xf]
    %v178 = vld [vmem:[%s176 + $0x4] sm:$0xf]
    %v179 = vld [vmem:[%s176 + $0x8] sm:$0xf]
    %v180 = vld [vmem:[%s176 + $0xc] sm:$0xf]
    %v181 = vld [vmem:[%s176 + $0x10] sm:$0xf]
    %v182 = vld [vmem:[%s176 + $0x14] sm:$0xf]
    %v183 = vld [vmem:[%s176 + $0x18] sm:$0xf]
    %v184 = vld [vmem:[%s176 + $0x1c] sm:$0xf]
    %v193 = vunpack.c.l.b16 %v168
    %v194 = vunpack.c.l.b16 %v169
    %v195 = vunpack.c.l.b16 %v170
    %v196 = vunpack.c.l.b16 %v171
    %v197 = vunpack.c.l.b16 %v172
    %v198 = vunpack.c.l.b16 %v173
    %v199 = vunpack.c.l.b16 %v174
    %v200 = vunpack.c.l.b16 %v175
    %v201 = vpack.c.b16 %v194, %v193
    %v202 = vpack.c.b16 %v196, %v195
    %v203 = vpack.c.b16 %v198, %v197
    %v204 = vpack.c.b16 %v200, %v199
    %v213 = vunpack.c.l.b16 %v177
    %v214 = vunpack.c.l.b16 %v178
    %v215 = vunpack.c.l.b16 %v179
    %v216 = vunpack.c.l.b16 %v180
    %v217 = vunpack.c.l.b16 %v181
    %v218 = vunpack.c.l.b16 %v182
    %v219 = vunpack.c.l.b16 %v183
    %v220 = vunpack.c.l.b16 %v184
    %v221 = vpack.c.b16 %v214, %v213
    %v222 = vpack.c.b16 %v216, %v215
    %v223 = vpack.c.b16 %v218, %v217
    %v224 = vpack.c.b16 %v220, %v219
    %v230 = vsel %vm89, %v201, 0
    %v233 = vsel %vm89, %v202, 0
    %v236 = vsel %vm89, %v203, 0
    %v239 = vsel %vm89, %v204, 0
    %241 = vmatprep.subr.bf16.mxu0 0
    %242 = vmatpush1.bf16.msra.mxu0 %v221
    %243 = vmatprep.subr.bf16.mxu0 0
    %244 = vmatpush1.bf16.msra.mxu0 %v222
    %245 = vmatprep.subr.bf16.mxu0 0
    %246 = vmatpush1.bf16.msra.mxu0 %v223
    %247 = vmatprep.subr.bf16.mxu0 0
    %248 = vmatpush1.bf16.msra.mxu0 %v224
    %249 = vmatprep.subr.bf16.mxu0 0
    %250 = vmatpush1.bf16.msra.mxu0 0
    %251 = vmatprep.subr.bf16.mxu0 0
    %252 = vmatpush1.bf16.msra.mxu0 0
    %253 = vmatprep.subr.bf16.mxu0 0
    %254 = vmatpush1.bf16.msra.mxu0 0
    %255 = vmatprep.subr.bf16.mxu0 0
    %256 = vmatpush1.bf16.msra.mxu0 0
    %257 = vmatprep.subr.bf16.mxu0 0
    %258 = vmatpush1.bf16.msra.mxu0 0
    %259 = vmatprep.subr.bf16.mxu0 0
    %260 = vmatpush1.bf16.msra.mxu0 0
    %261 = vmatprep.subr.bf16.mxu0 0
    %262 = vmatpush1.bf16.msra.mxu0 0
    %263 = vmatprep.subr.bf16.mxu0 0
    %264 = vmatpush1.bf16.msra.mxu0 0
    %265 = vmatprep.subr.bf16.mxu0 0
    %266 = vmatpush1.bf16.msra.mxu0 0
    %267 = vmatprep.subr.bf16.mxu0 0
    %268 = vmatpush1.bf16.msra.mxu0 0
    %269 = vmatprep.subr.bf16.mxu0 0
    %270 = vmatpush1.bf16.msra.mxu0 0
    %271 = vmatprep.subr.bf16.mxu0 0
    %272 = vmatpush1.bf16.msra.mxu0 0
    %273 = vmatprep.mubr.bf16.mxu0 0
    %274 = vmatmul.mubr.bf16.gmra.mrb[0].mxu0 %v230
    %v275 = vpop.f32.mrb[0].mxu0
    %v276 = vadd.f32 0.0, %v275
    %v277 = vpop.f32.mrb[0].mxu0
    %v278 = vpop.f32.mrb[0].mxu0
    %v279 = vadd.f32 0.0, %v278
    %v280 = vpop.f32.mrb[0].mxu0
    %281 = vmatprep.mubr.bf16.mxu0 0
    %282 = vmatmul.mubr.bf16.gmra.mrb[0].mxu0 %v233
    %v283 = vpop.f32.mrb[0].mxu0
    %v284 = vadd.f32 0.0, %v283
    %v285 = vpop.f32.mrb[0].mxu0
    %v286 = vpop.f32.mrb[0].mxu0
    %v287 = vadd.f32 0.0, %v286
    %v288 = vpop.f32.mrb[0].mxu0
    %289 = vmatprep.mubr.bf16.mxu0 0
    %290 = vmatmul.mubr.bf16.gmra.mrb[0].mxu0 %v236
    %v291 = vpop.f32.mrb[0].mxu0
    %v292 = vadd.f32 0.0, %v291
    %v293 = vpop.f32.mrb[0].mxu0
    %v294 = vpop.f32.mrb[0].mxu0
    %v295 = vadd.f32 0.0, %v294
    %v296 = vpop.f32.mrb[0].mxu0
    %297 = vmatprep.mubr.bf16.mxu0 0
    %298 = vmatmul.mubr.bf16.gmra.mrb[0].mxu0 %v239
    %v299 = vpop.f32.mrb[0].mxu0
    %v300 = vadd.f32 0.0, %v299
    %v301 = vpop.f32.mrb[0].mxu0
    %v302 = vpop.f32.mrb[0].mxu0
    %v303 = vadd.f32 0.0, %v302
    %v304 = vpop.f32.mrb[0].mxu0
    %305 = vdwg.mxu0
    %s306 = scalar_lea.vmem %s2, 64
    %v307 = vld [vmem:[%s306] sm:$0xf]
    %v308 = vld [vmem:[%s306 + $0x4] sm:$0xf]
    %v309 = vld [vmem:[%s306 + $0x8] sm:$0xf]
    %v310 = vld [vmem:[%s306 + $0xc] sm:$0xf]
    %v311 = vld [vmem:[%s306 + $0x10] sm:$0xf]
    %v312 = vld [vmem:[%s306 + $0x14] sm:$0xf]
    %v313 = vld [vmem:[%s306 + $0x18] sm:$0xf]
    %v314 = vld [vmem:[%s306 + $0x1c] sm:$0xf]
    %s315 = scalar_lea.vmem %s0, 64
    %v316 = vld [vmem:[%s315] sm:$0xf]
    %v317 = vld [vmem:[%s315 + $0x4] sm:$0xf]
    %v318 = vld [vmem:[%s315 + $0x8] sm:$0xf]
    %v319 = vld [vmem:[%s315 + $0xc] sm:$0xf]
    %v320 = vld [vmem:[%s315 + $0x10] sm:$0xf]
    %v321 = vld [vmem:[%s315 + $0x14] sm:$0xf]
    %v322 = vld [vmem:[%s315 + $0x18] sm:$0xf]
    %v323 = vld [vmem:[%s315 + $0x1c] sm:$0xf]
    %v332 = vunpack.c.l.b16 %v307
    %v333 = vunpack.c.l.b16 %v308
    %v334 = vunpack.c.l.b16 %v309
    %v335 = vunpack.c.l.b16 %v310
    %v336 = vunpack.c.l.b16 %v311
    %v337 = vunpack.c.l.b16 %v312
    %v338 = vunpack.c.l.b16 %v313
    %v339 = vunpack.c.l.b16 %v314
    %v340 = vpack.c.b16 %v333, %v332
    %v341 = vpack.c.b16 %v335, %v334
    %v342 = vpack.c.b16 %v337, %v336
    %v343 = vpack.c.b16 %v339, %v338
    %v352 = vunpack.c.l.b16 %v316
    %v353 = vunpack.c.l.b16 %v317
    %v354 = vunpack.c.l.b16 %v318
    %v355 = vunpack.c.l.b16 %v319
    %v356 = vunpack.c.l.b16 %v320
    %v357 = vunpack.c.l.b16 %v321
    %v358 = vunpack.c.l.b16 %v322
    %v359 = vunpack.c.l.b16 %v323
    %v360 = vpack.c.b16 %v353, %v352
    %v361 = vpack.c.b16 %v355, %v354
    %v362 = vpack.c.b16 %v357, %v356
    %v363 = vpack.c.b16 %v359, %v358
    %v369 = vsel %vm89, %v340, 0
    %v372 = vsel %vm89, %v341, 0
    %v375 = vsel %vm89, %v342, 0
    %v378 = vsel %vm89, %v343, 0
    %380 = vmatprep.subr.bf16.mxu0 0
    %381 = vmatpush1.bf16.msra.mxu0 %v360
    %382 = vmatprep.subr.bf16.mxu0 0
    %383 = vmatpush1.bf16.msra.mxu0 %v361
    %384 = vmatprep.subr.bf16.mxu0 0
    %385 = vmatpush1.bf16.msra.mxu0 %v362
    %386 = vmatprep.subr.bf16.mxu0 0
    %387 = vmatpush1.bf16.msra.mxu0 %v363
    %388 = vmatprep.subr.bf16.mxu0 0
    %389 = vmatpush1.bf16.msra.mxu0 0
    %390 = vmatprep.subr.bf16.mxu0 0
    %391 = vmatpush1.bf16.msra.mxu0 0
    %392 = vmatprep.subr.bf16.mxu0 0
    %393 = vmatpush1.bf16.msra.mxu0 0
    %394 = vmatprep.subr.bf16.mxu0 0
    %395 = vmatpush1.bf16.msra.mxu0 0
    %396 = vmatprep.subr.bf16.mxu0 0
    %397 = vmatpush1.bf16.msra.mxu0 0
    %398 = vmatprep.subr.bf16.mxu0 0
    %399 = vmatpush1.bf16.msra.mxu0 0
    %400 = vmatprep.subr.bf16.mxu0 0
    %401 = vmatpush1.bf16.msra.mxu0 0
    %402 = vmatprep.subr.bf16.mxu0 0
    %403 = vmatpush1.bf16.msra.mxu0 0
    %404 = vmatprep.subr.bf16.mxu0 0
    %405 = vmatpush1.bf16.msra.mxu0 0
    %406 = vmatprep.subr.bf16.mxu0 0
    %407 = vmatpush1.bf16.msra.mxu0 0
    %408 = vmatprep.subr.bf16.mxu0 0
    %409 = vmatpush1.bf16.msra.mxu0 0
    %410 = vmatprep.subr.bf16.mxu0 0
    %411 = vmatpush1.bf16.msra.mxu0 0
    %412 = vmatprep.mubr.bf16.mxu0 0
    %413 = vmatmul.mubr.bf16.gmra.mrb[0].mxu0 %v369
    %v414 = vpop.f32.mrb[0].mxu0
    %v415 = vadd.f32 0.0, %v414
    %v416 = vpop.f32.mrb[0].mxu0
    %v417 = vpop.f32.mrb[0].mxu0
    %v418 = vadd.f32 0.0, %v417
    %v419 = vpop.f32.mrb[0].mxu0
    %420 = vmatprep.mubr.bf16.mxu0 0
    %421 = vmatmul.mubr.bf16.gmra.mrb[0].mxu0 %v372
    %v422 = vpop.f32.mrb[0].mxu0
    %v423 = vadd.f32 0.0, %v422
    %v424 = vpop.f32.mrb[0].mxu0
    %v425 = vpop.f32.mrb[0].mxu0
    %v426 = vadd.f32 0.0, %v425
    %v427 = vpop.f32.mrb[0].mxu0
    %428 = vmatprep.mubr.bf16.mxu0 0
    %429 = vmatmul.mubr.bf16.gmra.mrb[0].mxu0 %v375
    %v430 = vpop.f32.mrb[0].mxu0
    %v431 = vadd.f32 0.0, %v430
    %v432 = vpop.f32.mrb[0].mxu0
    %v433 = vpop.f32.mrb[0].mxu0
    %v434 = vadd.f32 0.0, %v433
    %v435 = vpop.f32.mrb[0].mxu0
    %436 = vmatprep.mubr.bf16.mxu0 0
    %437 = vmatmul.mubr.bf16.gmra.mrb[0].mxu0 %v378
    %v438 = vpop.f32.mrb[0].mxu0
    %v439 = vadd.f32 0.0, %v438
    %v440 = vpop.f32.mrb[0].mxu0
    %v441 = vpop.f32.mrb[0].mxu0
    %v442 = vadd.f32 0.0, %v441
    %v443 = vpop.f32.mrb[0].mxu0
    %444 = vdwg.mxu0
    %s445 = scalar_lea.vmem %s2, 96
    %v446 = vld [vmem:[%s445] sm:$0xf]
    %v447 = vld [vmem:[%s445 + $0x4] sm:$0xf]
    %v448 = vld [vmem:[%s445 + $0x8] sm:$0xf]
    %v449 = vld [vmem:[%s445 + $0xc] sm:$0xf]
    %v450 = vld [vmem:[%s445 + $0x10] sm:$0xf]
    %v451 = vld [vmem:[%s445 + $0x14] sm:$0xf]
    %v452 = vld [vmem:[%s445 + $0x18] sm:$0xf]
    %v453 = vld [vmem:[%s445 + $0x1c] sm:$0xf]
    %s454 = scalar_lea.vmem %s0, 96
    %v455 = vld [vmem:[%s454] sm:$0xf]
    %v456 = vld [vmem:[%s454 + $0x4] sm:$0xf]
    %v457 = vld [vmem:[%s454 + $0x8] sm:$0xf]
    %v458 = vld [vmem:[%s454 + $0xc] sm:$0xf]
    %v459 = vld [vmem:[%s454 + $0x10] sm:$0xf]
    %v460 = vld [vmem:[%s454 + $0x14] sm:$0xf]
    %v461 = vld [vmem:[%s454 + $0x18] sm:$0xf]
    %v462 = vld [vmem:[%s454 + $0x1c] sm:$0xf]
    %v471 = vunpack.c.l.b16 %v446
    %v472 = vunpack.c.l.b16 %v447
    %v473 = vunpack.c.l.b16 %v448
    %v474 = vunpack.c.l.b16 %v449
    %v475 = vunpack.c.l.b16 %v450
    %v476 = vunpack.c.l.b16 %v451
    %v477 = vunpack.c.l.b16 %v452
    %v478 = vunpack.c.l.b16 %v453
    %v479 = vpack.c.b16 %v472, %v471
    %v480 = vpack.c.b16 %v474, %v473
    %v481 = vpack.c.b16 %v476, %v475
    %v482 = vpack.c.b16 %v478, %v477
    %v491 = vunpack.c.l.b16 %v455
    %v492 = vunpack.c.l.b16 %v456
    %v493 = vunpack.c.l.b16 %v457
    %v494 = vunpack.c.l.b16 %v458
    %v495 = vunpack.c.l.b16 %v459
    %v496 = vunpack.c.l.b16 %v460
    %v497 = vunpack.c.l.b16 %v461
    %v498 = vunpack.c.l.b16 %v462
    %v499 = vpack.c.b16 %v492, %v491
    %v500 = vpack.c.b16 %v494, %v493
    %v501 = vpack.c.b16 %v496, %v495
    %v502 = vpack.c.b16 %v498, %v497
    %v508 = vsel %vm89, %v479, 0
    %v511 = vsel %vm89, %v480, 0
    %v514 = vsel %vm89, %v481, 0
    %v517 = vsel %vm89, %v482, 0
    %519 = vmatprep.subr.bf16.mxu0 0
    %520 = vmatpush1.bf16.msra.mxu0 %v499
    %521 = vmatprep.subr.bf16.mxu0 0
    %522 = vmatpush1.bf16.msra.mxu0 %v500
    %523 = vmatprep.subr.bf16.mxu0 0
    %524 = vmatpush1.bf16.msra.mxu0 %v501
    %525 = vmatprep.subr.bf16.mxu0 0
    %526 = vmatpush1.bf16.msra.mxu0 %v502
    %527 = vmatprep.subr.bf16.mxu0 0
    %528 = vmatpush1.bf16.msra.mxu0 0
    %529 = vmatprep.subr.bf16.mxu0 0
    %530 = vmatpush1.bf16.msra.mxu0 0
    %531 = vmatprep.subr.bf16.mxu0 0
    %532 = vmatpush1.bf16.msra.mxu0 0
    %533 = vmatprep.subr.bf16.mxu0 0
    %534 = vmatpush1.bf16.msra.mxu0 0
    %535 = vmatprep.subr.bf16.mxu0 0
    %536 = vmatpush1.bf16.msra.mxu0 0
    %537 = vmatprep.subr.bf16.mxu0 0
    %538 = vmatpush1.bf16.msra.mxu0 0
    %539 = vmatprep.subr.bf16.mxu0 0
    %540 = vmatpush1.bf16.msra.mxu0 0
    %541 = vmatprep.subr.bf16.mxu0 0
    %542 = vmatpush1.bf16.msra.mxu0 0
    %543 = vmatprep.subr.bf16.mxu0 0
    %544 = vmatpush1.bf16.msra.mxu0 0
    %545 = vmatprep.subr.bf16.mxu0 0
    %546 = vmatpush1.bf16.msra.mxu0 0
    %547 = vmatprep.subr.bf16.mxu0 0
    %548 = vmatpush1.bf16.msra.mxu0 0
    %549 = vmatprep.subr.bf16.mxu0 0
    %550 = vmatpush1.bf16.msra.mxu0 0
    %551 = vmatprep.mubr.bf16.mxu0 0
    %552 = vmatmul.mubr.bf16.gmra.mrb[0].mxu0 %v508
    %v553 = vpop.f32.mrb[0].mxu0
    %v554 = vadd.f32 0.0, %v553
    %v555 = vpop.f32.mrb[0].mxu0
    %v556 = vpop.f32.mrb[0].mxu0
    %v557 = vadd.f32 0.0, %v556
    %v558 = vpop.f32.mrb[0].mxu0
    %559 = vmatprep.mubr.bf16.mxu0 0
    %560 = vmatmul.mubr.bf16.gmra.mrb[0].mxu0 %v511
    %v561 = vpop.f32.mrb[0].mxu0
    %v562 = vadd.f32 0.0, %v561
    %v563 = vpop.f32.mrb[0].mxu0
    %v564 = vpop.f32.mrb[0].mxu0
    %v565 = vadd.f32 0.0, %v564
    %v566 = vpop.f32.mrb[0].mxu0
    %567 = vmatprep.mubr.bf16.mxu0 0
    %568 = vmatmul.mubr.bf16.gmra.mrb[0].mxu0 %v514
    %v569 = vpop.f32.mrb[0].mxu0
    %v570 = vadd.f32 0.0, %v569
    %v571 = vpop.f32.mrb[0].mxu0
    %v572 = vpop.f32.mrb[0].mxu0
    %v573 = vadd.f32 0.0, %v572
    %v574 = vpop.f32.mrb[0].mxu0
    %575 = vmatprep.mubr.bf16.mxu0 0
    %576 = vmatmul.mubr.bf16.gmra.mrb[0].mxu0 %v517
    %v577 = vpop.f32.mrb[0].mxu0
    %v578 = vadd.f32 0.0, %v577
    %v579 = vpop.f32.mrb[0].mxu0
    %v580 = vpop.f32.mrb[0].mxu0
    %v581 = vadd.f32 0.0, %v580
    %v582 = vpop.f32.mrb[0].mxu0
    %583 = vdwg.mxu0
    %v584 = vld [vmem:[#allocation2] sm:$0xff]
    %v585 = vld [vmem:[#allocation2 + $0x8] sm:$0xff]
    %v586 = vld [vmem:[#allocation2 + $0x10] sm:$0xff]
    %v587 = vld [vmem:[#allocation2 + $0x18] sm:$0xff]
    %v588 = vld [vmem:[#allocation2 + $0x20] sm:$0xff]
    %v589 = vld [vmem:[#allocation2 + $0x28] sm:$0xff]
    %v590 = vld [vmem:[#allocation2 + $0x30] sm:$0xff]
    %v591 = vld [vmem:[#allocation2 + $0x38] sm:$0xff]
    %600 = vrot.lane.b32.xlu0 %v276, 16
    %v601 = vpop.permute.xlu0 %600
    %602 = vrot.lane.b32.xlu0 %v279, 16
    %v603 = vpop.permute.xlu0 %602
    %604 = vrot.lane.b32.xlu0 %v284, 16
    %v605 = vpop.permute.xlu0 %604
    %606 = vrot.lane.b32.xlu0 %v287, 16
    %v607 = vpop.permute.xlu0 %606
    %608 = vrot.lane.b32.xlu0 %v292, 16
    %v609 = vpop.permute.xlu0 %608
    %610 = vrot.lane.b32.xlu0 %v295, 16
    %v611 = vpop.permute.xlu0 %610
    %612 = vrot.lane.b32.xlu0 %v300, 16
    %v613 = vpop.permute.xlu0 %612
    %614 = vrot.lane.b32.xlu0 %v303, 16
    %v615 = vpop.permute.xlu0 %614
    %632 = vrot.lane.b32.xlu0 %v415, 32
    %v633 = vpop.permute.xlu0 %632
    %634 = vrot.lane.b32.xlu0 %v418, 32
    %v635 = vpop.permute.xlu0 %634
    %636 = vrot.lane.b32.xlu0 %v423, 32
    %v637 = vpop.permute.xlu0 %636
    %638 = vrot.lane.b32.xlu0 %v426, 32
    %v639 = vpop.permute.xlu0 %638
    %640 = vrot.lane.b32.xlu0 %v431, 32
    %v641 = vpop.permute.xlu0 %640
    %642 = vrot.lane.b32.xlu0 %v434, 32
    %v643 = vpop.permute.xlu0 %642
    %644 = vrot.lane.b32.xlu0 %v439, 32
    %v645 = vpop.permute.xlu0 %644
    %646 = vrot.lane.b32.xlu0 %v442, 32
    %v647 = vpop.permute.xlu0 %646
    %664 = vrot.lane.b32.xlu0 %v554, 48
    %v665 = vpop.permute.xlu0 %664
    %666 = vrot.lane.b32.xlu0 %v557, 48
    %v667 = vpop.permute.xlu0 %666
    %668 = vrot.lane.b32.xlu0 %v562, 48
    %v669 = vpop.permute.xlu0 %668
    %670 = vrot.lane.b32.xlu0 %v565, 48
    %v671 = vpop.permute.xlu0 %670
    %672 = vrot.lane.b32.xlu0 %v570, 48
    %v673 = vpop.permute.xlu0 %672
    %674 = vrot.lane.b32.xlu0 %v573, 48
    %v675 = vpop.permute.xlu0 %674
    %676 = vrot.lane.b32.xlu0 %v578, 48
    %v677 = vpop.permute.xlu0 %676
    %678 = vrot.lane.b32.xlu0 %v581, 48
    %v679 = vpop.permute.xlu0 %678
    %vm688 = vcmask 130048
    %v689 = vsel %vm688, %v137, %v601
    %v690 = vsel %vm688, %v140, %v603
    %v691 = vsel %vm688, %v145, %v605
    %v692 = vsel %vm688, %v148, %v607
    %v693 = vsel %vm688, %v153, %v609
    %v694 = vsel %vm688, %v156, %v611
    %v695 = vsel %vm688, %v161, %v613
    %v696 = vsel %vm688, %v164, %v615
    %vm697 = vcmask 261120
    %v698 = vsel %vm697, %v689, %v633
    %v699 = vsel %vm697, %v690, %v635
    %v700 = vsel %vm697, %v691, %v637
    %v701 = vsel %vm697, %v692, %v639
    %v702 = vsel %vm697, %v693, %v641
    %v703 = vsel %vm697, %v694, %v643
    %v704 = vsel %vm697, %v695, %v645
    %v705 = vsel %vm697, %v696, %v647
    %vm706 = vcmask 392192
    %v707 = vsel %vm706, %v698, %v665
    %v708 = vsel %vm706, %v699, %v667
    %v709 = vsel %vm706, %v700, %v669
    %v710 = vsel %vm706, %v701, %v671
    %v711 = vsel %vm706, %v702, %v673
    %v712 = vsel %vm706, %v703, %v675
    %v713 = vsel %vm706, %v704, %v677
    %v714 = vsel %vm706, %v705, %v679
    %v715 = vadd.f32 %v584, %v707
    %v716 = vadd.f32 %v585, %v708
    %v717 = vadd.f32 %v586, %v709
    %v718 = vadd.f32 %v587, %v710
    %v719 = vadd.f32 %v588, %v711
    %v720 = vadd.f32 %v589, %v712
    %v721 = vadd.f32 %v590, %v713
    %v722 = vadd.f32 %v591, %v714
    %723 = vst.msk [vmem:[#allocation2] sm:$0xff] %vm89, %v715
    %724 = vst.msk [vmem:[#allocation2 + $0x8] sm:$0xff] %vm89, %v716
    %725 = vst.msk [vmem:[#allocation2 + $0x10] sm:$0xff] %vm89, %v717
    %726 = vst.msk [vmem:[#allocation2 + $0x18] sm:$0xff] %vm89, %v718
    %727 = vst.msk [vmem:[#allocation2 + $0x20] sm:$0xff] %vm89, %v719
    %728 = vst.msk [vmem:[#allocation2 + $0x28] sm:$0xff] %vm89, %v720
    %729 = vst.msk [vmem:[#allocation2 + $0x30] sm:$0xff] %vm89, %v721
    %730 = vst.msk [vmem:[#allocation2 + $0x38] sm:$0xff] %vm89, %v722
    // Predicated region
    $region18: #{geomgcn_single_channel.1} parent=1 // pred_check
      %p731 = pneg %p16
    $region19: #{geomgcn_single_channel.1} parent=1 // pred_check_branch
      %733 = sbr.rel (%p731) target = $region21
    $region20: #{geomgcn_single_channel.1} parent=1 // pred_region
      %v734 = vld [vmem:[#allocation2] sm:$0xff]
      %v735 = vld [vmem:[#allocation2 + $0x8] sm:$0xff]
      %v736 = vld [vmem:[#allocation2 + $0x10] sm:$0xff]
      %v737 = vld [vmem:[#allocation2 + $0x18] sm:$0xff]
      %v738 = vld [vmem:[#allocation2 + $0x20] sm:$0xff]
      %v739 = vld [vmem:[#allocation2 + $0x28] sm:$0xff]
      %v740 = vld [vmem:[#allocation2 + $0x30] sm:$0xff]
      %v741 = vld [vmem:[#allocation2 + $0x38] sm:$0xff]
      %v742 = vld [vmem:[%s1] sm:$0xff]
      %v743 = vld [vmem:[%s1 + $0x8] sm:$0xff]
      %v744 = vld [vmem:[%s1 + $0x10] sm:$0xff]
      %v745 = vld [vmem:[%s1 + $0x18] sm:$0xff]
      %v746 = vld [vmem:[%s1 + $0x20] sm:$0xff]
      %v747 = vld [vmem:[%s1 + $0x28] sm:$0xff]
      %v748 = vld [vmem:[%s1 + $0x30] sm:$0xff]
      %v749 = vld [vmem:[%s1 + $0x38] sm:$0xff]
      %751 = vset.pattern.permute.xlu0 0
      %752 = vperm.xlu0 %751, %v742
      %v753 = vpop.permute.xlu0 %752
      %756 = vset.pattern.permute.xlu0 0
      %757 = vperm.xlu0 %756, %v743
      %v758 = vpop.permute.xlu0 %757
      %761 = vset.pattern.permute.xlu0 0
      %762 = vperm.xlu0 %761, %v744
      %v763 = vpop.permute.xlu0 %762
      %766 = vset.pattern.permute.xlu0 0
      %767 = vperm.xlu0 %766, %v745
      %v768 = vpop.permute.xlu0 %767
      %771 = vset.pattern.permute.xlu0 0
      %772 = vperm.xlu0 %771, %v746
      %v773 = vpop.permute.xlu0 %772
      %776 = vset.pattern.permute.xlu0 0
      %777 = vperm.xlu0 %776, %v747
      %v778 = vpop.permute.xlu0 %777
      %781 = vset.pattern.permute.xlu0 0
      %782 = vperm.xlu0 %781, %v748
      %v783 = vpop.permute.xlu0 %782
      %786 = vset.pattern.permute.xlu0 0
      %787 = vperm.xlu0 %786, %v749
      %v788 = vpop.permute.xlu0 %787
      %v790 = vmul.f32 %v734, %v753
      %v791 = vmul.f32 %v735, %v758
      %v792 = vmul.f32 %v736, %v763
      %v793 = vmul.f32 %v737, %v768
      %v794 = vmul.f32 %v738, %v773
      %v795 = vmul.f32 %v739, %v778
      %v796 = vmul.f32 %v740, %v783
      %v797 = vmul.f32 %v741, %v788
      %v798 = vmax.f32 %v790, 0.0
      %v799 = vmax.f32 %v791, 0.0
      %v800 = vmax.f32 %v792, 0.0
      %v801 = vmax.f32 %v793, 0.0
      %v802 = vmax.f32 %v794, 0.0
      %v803 = vmax.f32 %v795, 0.0
      %v804 = vmax.f32 %v796, 0.0
      %v805 = vmax.f32 %v797, 0.0
      %806 = vst.msk [vmem:[#allocation3] sm:$0xff] %vm89, %v798
      %807 = vst.msk [vmem:[#allocation3 + $0x8] sm:$0xff] %vm89, %v799
      %808 = vst.msk [vmem:[#allocation3 + $0x10] sm:$0xff] %vm89, %v800
      %809 = vst.msk [vmem:[#allocation3 + $0x18] sm:$0xff] %vm89, %v801
      %810 = vst.msk [vmem:[#allocation3 + $0x20] sm:$0xff] %vm89, %v802
      %811 = vst.msk [vmem:[#allocation3 + $0x28] sm:$0xff] %vm89, %v803
      %812 = vst.msk [vmem:[#allocation3 + $0x30] sm:$0xff] %vm89, %v804
      %813 = vst.msk [vmem:[#allocation3 + $0x38] sm:$0xff] %vm89, %v805
    $region21: #{geomgcn_single_channel.1} parent=1 // pred_fallthru
      _
    // Predicated region
    $region22: #{geomgcn_single_channel.1} parent=1 // pred_check
      _
    $region23: #{geomgcn_single_channel.1} parent=1 // pred_check_branch
      %815 = sbr.rel (0) target = $region25
    $region24: #{geomgcn_single_channel.1} parent=1 // pred_region
      %s817 = ssub.s32 1024, 1024
      %818 = vsyncadd [#allocation4], %s817
      %s819 = sshll.u32 [#allocation3], 4
      %s820 = int_to_ptr.vmem [resolvable:$true] %s819
      %825 = dma.vmem_to_hbm [thread:$0]  %s820, 1024, %s3, [#allocation4], 128, 128, 8
    $region25: #{geomgcn_single_channel.1} parent=1 // pred_fallthru
      _
    // Predicated region
    $region26: #{geomgcn_single_channel.1} parent=1 // pred_check
      _
    $region27: #{geomgcn_single_channel.1} parent=1 // pred_check_branch
      %827 = sbr.rel (0) target = $region29
    $region28: #{geomgcn_single_channel.1} parent=1 // pred_region
      %828 = dma.done [#allocation4], 1024
    $region29: #{geomgcn_single_channel.1} parent=1 // pred_fallthru
      _
    %829 = vsyncpa [#allocation4], 1

</llo_original>
